<compile_context>
chip_gen: v7x
topology: tpu7x:2x2x1
jax: 0.10.0
libtpu: 0.0.40
codegen_flags: <defaults>
</compile_context>

<pallas_src>
import functools

import jax
import jax.numpy as jnp
from jax.experimental import pallas as pl
from jax.experimental.pallas import tpu as pltpu


def _round_up(x, m):
    return ((x + m - 1) // m) * m


def _cdiv(a, b):
    return -(-a // b)


def _cgpnet_fused_kernel(*refs, n_layer, widths, k_first):
    """Fused chrome chain for one batch tile.

    refs layout:
      refs[0]                      : x tile, (TM, Dc)  (only the columns the
                                     first CGP layer reads, Dc in {1, 2})
      refs[1 : 1+n_layer]          : per-layer Linear weights, each (1, H_i)
      refs[1+n_layer : 1+2n_layer] : per-layer biases,          each (1, H_i)
      refs[1+2n_layer : ]          : per-layer outputs,         each (TM, H_i)
    """
    x_ref = refs[0]
    w_refs = refs[1:1 + n_layer]
    b_refs = refs[1 + n_layer:1 + 2 * n_layer]
    o_refs = refs[1 + 2 * n_layer:]

    x = x_ref[...]
    x0 = x[:, 0:1]
    xk = x[:, k_first:k_first + 1]

    for i, H in enumerate(widths):
        w = w_refs[i][...]                       # (1, H)
        b = b_refs[i][...]                       # (1, H)

        # CGPLayer (fixed deterministic genome): sin(x0 + xk) + x0 * xk
        cgp = jnp.sin(x0 + xk) + x0 * xk         # (TM, 1)

        # Linear(1, H) as a rank-1 broadcast (VPU, not MXU). The wide result
        # feeds only the store; it is never carried to the next layer.
        o_refs[i][...] = (cgp * w + b).astype(o_refs[i].dtype)

        if i + 1 < n_layer:
            # Chain on the narrow cgp column: next layer reads columns 0 and k
            # of h = cgp*w + b, reconstructed from two scalar weight columns.
            k = min(1, H - 1)
            x0 = cgp * w[:, 0:1] + b[:, 0:1]     # (TM, 1)
            xk = cgp * w[:, k:k + 1] + b[:, k:k + 1]


def cgpnet_forward(x, params, *, max_tm=2048, vmem_budget_bytes=8 << 20):
    """Fused CGPNet forward: returns the list of every chrome's output.

    x:      (N, D) float32
    params: list of (w_t, b) with w_t (1, H_i), b (1, H_i)
    """
    N, D = x.shape
    dtype = x.dtype
    itemsize = jnp.dtype(dtype).itemsize

    # Only columns 0..k of x are read by the first CGP layer.
    k0 = min(1, D - 1)
    xs = x[:, :k0 + 1]
    Dc = k0 + 1

    widths = tuple(int(w.shape[1]) for (w, _) in params)
    n_layer = len(widths)
    total_cols = sum(widths)

    # ---- batch tiling -------------------------------------------------
    # Cap TM by a per-tile VMEM budget: double-buffered input + outputs.
    per_row_bytes = 2 * (Dc + total_cols) * itemsize
    tm_cap = max(8, (vmem_budget_bytes // max(per_row_bytes, 1)) // 8 * 8)
    tm_max = max(8, min(max_tm, tm_cap))

    num_tiles = _cdiv(N, tm_max)
    if N >= 16:
        num_tiles = max(num_tiles, 2)        # keep both v7x TensorCores busy
        if num_tiles % 2:
            num_tiles += 1                   # even count -> balanced split
    TM = _round_up(_cdiv(N, num_tiles), 8)   # bounds padding to <8 rows/tile
    Npad = num_tiles * TM
    if Npad != N:
        xs = jnp.pad(xs, ((0, Npad - N), (0, 0)))

    w_list = [w.astype(dtype) for (w, _) in params]
    b_list = [b.astype(dtype) for (_, b) in params]

    kernel = functools.partial(
        _cgpnet_fused_kernel, n_layer=n_layer, widths=widths, k_first=k0)

    in_specs = [pl.BlockSpec((TM, Dc), lambda i: (i, 0))]
    for H in widths:                                     # weights
        in_specs.append(pl.BlockSpec((1, H), lambda i: (0, 0)))
    for H in widths:                                     # biases
        in_specs.append(pl.BlockSpec((1, H), lambda i: (0, 0)))

    out_shape = tuple(jax.ShapeDtypeStruct((Npad, H), dtype) for H in widths)
    out_specs = tuple(pl.BlockSpec((TM, H), lambda i: (i, 0)) for H in widths)

    # Explicit scoped-VMEM limit: safe across v5e (16 MiB default) .. v7x
    # (64 MiB physical). Our working set is budgeted <= ~8 MiB.
    est_vmem = (2 * TM * (Dc + total_cols) * itemsize
                + 4 * total_cols * itemsize + (1 << 20))
    vmem_limit = int(min(48 << 20, max(32 << 20, 2 * est_vmem)))

    outs = pl.pallas_call(
        kernel,
        out_shape=out_shape,
        grid=(num_tiles,),
        in_specs=in_specs,
        out_specs=out_specs,
        compiler_params=pltpu.CompilerParams(
            dimension_semantics=("parallel",),
            vmem_limit_bytes=vmem_limit),
    )(xs, *w_list, *b_list)

    # Drop row padding only when we actually padded (avoids an XLA copy pass).
    if Npad != N:
        return [o[:N] for o in outs]
    return list(outs)


class CGPNetPallas:
    """JAX/Pallas reimplementation of CGPNet.forward."""

    def __init__(self, n_input, n_output, n_hiddens, key):
        self.n_input = n_input
        self.n_output = n_output
        self.n_hiddens = list(n_hiddens)
        self.n_layer = len(n_hiddens) + 1

        # Deterministic parameter init, mimicking nn.Linear(1, H) default:
        # weight, bias ~ U(-1/sqrt(fan_in), 1/sqrt(fan_in)) with fan_in = 1.
        dims_out = self.n_hiddens + [n_output]
        self.params = []
        for H in dims_out:
            key, kw, kb = jax.random.split(key, 3)
            w_t = jax.random.uniform(kw, (1, H), jnp.float32, -1.0, 1.0)
            b = jax.random.uniform(kb, (1, H), jnp.float32, -1.0, 1.0)
            self.params.append((w_t, b))

        # One jitted graph for the whole fused forward (shapes are static).
        self._forward = jax.jit(cgpnet_forward)

    def __call__(self, x):
        # Matches CGPNet.forward: return the list of every chrome's output.
        return self._forward(x, self.params)


def _reference_forward(x, params):
    """Pure-JAX reference of the same forward pass (for a sanity check)."""
    outputs = []
    h = x
    for (w_t, b) in params:
        k = min(1, h.shape[1] - 1)
        x0 = h[:, 0:1]
        xk = h[:, k:k + 1]
        cgp = jnp.sin(x0 + xk) + x0 * xk
        h = cgp * w_t + b
        outputs.append(h)
    return outputs


if __name__ == "__main__":
    key = jax.random.PRNGKey(0)
    key, kx, kp = jax.random.split(key, 3)

    # Small shapes consistent with the module: tabular (batch, n_input).
    batch, n_input = 8, 4
    n_hiddens = [32, 16]
    n_output = 3

    x = jax.random.normal(kx, (batch, n_input), jnp.float32)

    net = CGPNetPallas(n_input, n_output, n_hiddens, kp)

    outs = net(x)
    for o in outs:
        jax.block_until_ready(o)

    # Sanity check against a pure-JAX reference.
    refs = _reference_forward(x, net.params)
    assert len(outs) == len(refs) == net.n_layer
    expected_shapes = [(batch, h) for h in n_hiddens] + [(batch, n_output)]
    for o, r, s in zip(outs, refs, expected_shapes):
        assert o.shape == s, (o.shape, s)
        assert jnp.allclose(o, r, atol=1e-5, rtol=1e-5)

    print("KERNEL_OK")
</pallas_src>

<mosaic_0001>
module attributes {stable_mosaic.version = 11 : i64} {
  func.func @_cgpnet_fused_kernel(%arg0: i32, %arg1: memref<8x2xf32, #tpu.memory_space<vmem>>, %arg2: memref<1x32xf32, #tpu.memory_space<vmem>>, %arg3: memref<1x16xf32, #tpu.memory_space<vmem>>, %arg4: memref<1x3xf32, #tpu.memory_space<vmem>>, %arg5: memref<1x32xf32, #tpu.memory_space<vmem>>, %arg6: memref<1x16xf32, #tpu.memory_space<vmem>>, %arg7: memref<1x3xf32, #tpu.memory_space<vmem>>, %arg8: memref<8x32xf32, #tpu.memory_space<vmem>>, %arg9: memref<8x16xf32, #tpu.memory_space<vmem>>, %arg10: memref<8x3xf32, #tpu.memory_space<vmem>>) attributes {dimension_semantics = [#tpu.dimension_semantics<parallel>], iteration_bounds = array<i64: 1>, scalar_prefetch = 0 : i64, scratch_operands = 0 : i64, tpu.core_type = #tpu.core_type<tc>, window_params = [{transform_indices = @transform_0, window_bounds = array<i64: 8, 2>}, {pipeline_mode = #tpu.pipeline_mode<synchronous>, transform_indices = @transform_1, window_bounds = array<i64: 1, 32>}, {pipeline_mode = #tpu.pipeline_mode<synchronous>, transform_indices = @transform_2, window_bounds = array<i64: 1, 16>}, {pipeline_mode = #tpu.pipeline_mode<synchronous>, transform_indices = @transform_3, window_bounds = array<i64: 1, 3>}, {pipeline_mode = #tpu.pipeline_mode<synchronous>, transform_indices = @transform_4, window_bounds = array<i64: 1, 32>}, {pipeline_mode = #tpu.pipeline_mode<synchronous>, transform_indices = @transform_5, window_bounds = array<i64: 1, 16>}, {pipeline_mode = #tpu.pipeline_mode<synchronous>, transform_indices = @transform_6, window_bounds = array<i64: 1, 3>}, {transform_indices = @transform_7, window_bounds = array<i64: 8, 32>}, {transform_indices = @transform_8, window_bounds = array<i64: 8, 16>}, {transform_indices = @transform_9, window_bounds = array<i64: 8, 3>}]} {
    %c0 = arith.constant 0 : index
    %c0_0 = arith.constant 0 : index
    %0 = vector.load %arg1[%c0, %c0_0] : memref<8x2xf32, #tpu.memory_space<vmem>>, vector<8x2xf32>
    %1 = vector.extract_strided_slice %0 {offsets = [0, 0], sizes = [8, 1], strides = [1, 1]} : vector<8x2xf32> to vector<8x1xf32>
    %2 = vector.extract_strided_slice %0 {offsets = [0, 1], sizes = [8, 1], strides = [1, 1]} : vector<8x2xf32> to vector<8x1xf32>
    %c0_1 = arith.constant 0 : index
    %c0_2 = arith.constant 0 : index
    %3 = vector.load %arg2[%c0_1, %c0_2] : memref<1x32xf32, #tpu.memory_space<vmem>>, vector<1x32xf32>
    %c0_3 = arith.constant 0 : index
    %c0_4 = arith.constant 0 : index
    %4 = vector.load %arg5[%c0_3, %c0_4] : memref<1x32xf32, #tpu.memory_space<vmem>>, vector<1x32xf32>
    %5 = arith.addf %1, %2 : vector<8x1xf32>
    %6 = math.sin %5 : vector<8x1xf32>
    %7 = arith.mulf %1, %2 : vector<8x1xf32>
    %8 = arith.addf %6, %7 : vector<8x1xf32>
    %9 = vector.broadcast %8 : vector<8x1xf32> to vector<8x32xf32>
    %10 = vector.broadcast %3 : vector<1x32xf32> to vector<8x32xf32>
    %11 = arith.mulf %9, %10 : vector<8x32xf32>
    %12 = vector.broadcast %4 : vector<1x32xf32> to vector<8x32xf32>
    %13 = arith.addf %11, %12 : vector<8x32xf32>
    %c0_5 = arith.constant 0 : index
    %c0_6 = arith.constant 0 : index
    %14 = vector.load %arg8[%c0_5, %c0_6] : memref<8x32xf32, #tpu.memory_space<vmem>>, vector<8x32xf32>
    tpu.vector_store %arg8[%c0_5, %c0_6], %13 {strides = array<i32>} : memref<8x32xf32, #tpu.memory_space<vmem>>, vector<8x32xf32>,
    %15 = vector.extract_strided_slice %3 {offsets = [0, 0], sizes = [1, 1], strides = [1, 1]} : vector<1x32xf32> to vector<1x1xf32>
    %16 = vector.broadcast %15 : vector<1x1xf32> to vector<8x1xf32>
    %17 = arith.mulf %8, %16 : vector<8x1xf32>
    %18 = vector.extract_strided_slice %4 {offsets = [0, 0], sizes = [1, 1], strides = [1, 1]} : vector<1x32xf32> to vector<1x1xf32>
    %19 = vector.broadcast %18 : vector<1x1xf32> to vector<8x1xf32>
    %20 = arith.addf %17, %19 : vector<8x1xf32>
    %21 = vector.extract_strided_slice %3 {offsets = [0, 1], sizes = [1, 1], strides = [1, 1]} : vector<1x32xf32> to vector<1x1xf32>
    %22 = vector.broadcast %21 : vector<1x1xf32> to vector<8x1xf32>
    %23 = arith.mulf %8, %22 : vector<8x1xf32>
    %24 = vector.extract_strided_slice %4 {offsets = [0, 1], sizes = [1, 1], strides = [1, 1]} : vector<1x32xf32> to vector<1x1xf32>
    %25 = vector.broadcast %24 : vector<1x1xf32> to vector<8x1xf32>
    %26 = arith.addf %23, %25 : vector<8x1xf32>
    %c0_7 = arith.constant 0 : index
    %c0_8 = arith.constant 0 : index
    %27 = vector.load %arg3[%c0_7, %c0_8] : memref<1x16xf32, #tpu.memory_space<vmem>>, vector<1x16xf32>
    %c0_9 = arith.constant 0 : index
    %c0_10 = arith.constant 0 : index
    %28 = vector.load %arg6[%c0_9, %c0_10] : memref<1x16xf32, #tpu.memory_space<vmem>>, vector<1x16xf32>
    %29 = arith.addf %20, %26 : vector<8x1xf32>
    %30 = math.sin %29 : vector<8x1xf32>
    %31 = arith.mulf %20, %26 : vector<8x1xf32>
    %32 = arith.addf %30, %31 : vector<8x1xf32>
    %33 = vector.broadcast %32 : vector<8x1xf32> to vector<8x16xf32>
    %34 = vector.broadcast %27 : vector<1x16xf32> to vector<8x16xf32>
    %35 = arith.mulf %33, %34 : vector<8x16xf32>
    %36 = vector.broadcast %28 : vector<1x16xf32> to vector<8x16xf32>
    %37 = arith.addf %35, %36 : vector<8x16xf32>
    %c0_11 = arith.constant 0 : index
    %c0_12 = arith.constant 0 : index
    %38 = vector.load %arg9[%c0_11, %c0_12] : memref<8x16xf32, #tpu.memory_space<vmem>>, vector<8x16xf32>
    tpu.vector_store %arg9[%c0_11, %c0_12], %37 {strides = array<i32>} : memref<8x16xf32, #tpu.memory_space<vmem>>, vector<8x16xf32>,
    %39 = vector.extract_strided_slice %27 {offsets = [0, 0], sizes = [1, 1], strides = [1, 1]} : vector<1x16xf32> to vector<1x1xf32>
    %40 = vector.broadcast %39 : vector<1x1xf32> to vector<8x1xf32>
    %41 = arith.mulf %32, %40 : vector<8x1xf32>
    %42 = vector.extract_strided_slice %28 {offsets = [0, 0], sizes = [1, 1], strides = [1, 1]} : vector<1x16xf32> to vector<1x1xf32>
    %43 = vector.broadcast %42 : vector<1x1xf32> to vector<8x1xf32>
    %44 = arith.addf %41, %43 : vector<8x1xf32>
    %45 = vector.extract_strided_slice %27 {offsets = [0, 1], sizes = [1, 1], strides = [1, 1]} : vector<1x16xf32> to vector<1x1xf32>
    %46 = vector.broadcast %45 : vector<1x1xf32> to vector<8x1xf32>
    %47 = arith.mulf %32, %46 : vector<8x1xf32>
    %48 = vector.extract_strided_slice %28 {offsets = [0, 1], sizes = [1, 1], strides = [1, 1]} : vector<1x16xf32> to vector<1x1xf32>
    %49 = vector.broadcast %48 : vector<1x1xf32> to vector<8x1xf32>
    %50 = arith.addf %47, %49 : vector<8x1xf32>
    %c0_13 = arith.constant 0 : index
    %c0_14 = arith.constant 0 : index
    %51 = vector.load %arg4[%c0_13, %c0_14] : memref<1x3xf32, #tpu.memory_space<vmem>>, vector<1x3xf32>
    %c0_15 = arith.constant 0 : index
    %c0_16 = arith.constant 0 : index
    %52 = vector.load %arg7[%c0_15, %c0_16] : memref<1x3xf32, #tpu.memory_space<vmem>>, vector<1x3xf32>
    %53 = arith.addf %44, %50 : vector<8x1xf32>
    %54 = math.sin %53 : vector<8x1xf32>
    %55 = arith.mulf %44, %50 : vector<8x1xf32>
    %56 = arith.addf %54, %55 : vector<8x1xf32>
    %57 = vector.broadcast %56 : vector<8x1xf32> to vector<8x3xf32>
    %58 = vector.broadcast %51 : vector<1x3xf32> to vector<8x3xf32>
    %59 = arith.mulf %57, %58 : vector<8x3xf32>
    %60 = vector.broadcast %52 : vector<1x3xf32> to vector<8x3xf32>
    %61 = arith.addf %59, %60 : vector<8x3xf32>
    %c0_17 = arith.constant 0 : index
    %c0_18 = arith.constant 0 : index
    %62 = vector.load %arg10[%c0_17, %c0_18] : memref<8x3xf32, #tpu.memory_space<vmem>>, vector<8x3xf32>
    tpu.vector_store %arg10[%c0_17, %c0_18], %61 {strides = array<i32>} : memref<8x3xf32, #tpu.memory_space<vmem>>, vector<8x3xf32>,
    return
  }
  func.func @transform_0(%arg0: i32) -> (i32, i32) {
    %c0_i32 = arith.constant 0 : i32
    %c0_i32_0 = arith.constant 0 : i32
    return %arg0, %c0_i32 : i32, i32
  }
  func.func @transform_1(%arg0: i32) -> (i32, i32) {
    %c0_i32 = arith.constant 0 : i32
    %c0_i32_0 = arith.constant 0 : i32
    %c0_i32_1 = arith.constant 0 : i32
    return %c0_i32, %c0_i32_0 : i32, i32
  }
  func.func @transform_2(%arg0: i32) -> (i32, i32) {
    %c0_i32 = arith.constant 0 : i32
    %c0_i32_0 = arith.constant 0 : i32
    %c0_i32_1 = arith.constant 0 : i32
    return %c0_i32, %c0_i32_0 : i32, i32
  }
  func.func @transform_3(%arg0: i32) -> (i32, i32) {
    %c0_i32 = arith.constant 0 : i32
    %c0_i32_0 = arith.constant 0 : i32
    %c0_i32_1 = arith.constant 0 : i32
    return %c0_i32, %c0_i32_0 : i32, i32
  }
  func.func @transform_4(%arg0: i32) -> (i32, i32) {
    %c0_i32 = arith.constant 0 : i32
    %c0_i32_0 = arith.constant 0 : i32
    %c0_i32_1 = arith.constant 0 : i32
    return %c0_i32, %c0_i32_0 : i32, i32
  }
  func.func @transform_5(%arg0: i32) -> (i32, i32) {
    %c0_i32 = arith.constant 0 : i32
    %c0_i32_0 = arith.constant 0 : i32
    %c0_i32_1 = arith.constant 0 : i32
    return %c0_i32, %c0_i32_0 : i32, i32
  }
  func.func @transform_6(%arg0: i32) -> (i32, i32) {
    %c0_i32 = arith.constant 0 : i32
    %c0_i32_0 = arith.constant 0 : i32
    %c0_i32_1 = arith.constant 0 : i32
    return %c0_i32, %c0_i32_0 : i32, i32
  }
  func.func @transform_7(%arg0: i32) -> (i32, i32) {
    %c0_i32 = arith.constant 0 : i32
    %c0_i32_0 = arith.constant 0 : i32
    return %arg0, %c0_i32 : i32, i32
  }
  func.func @transform_8(%arg0: i32) -> (i32, i32) {
    %c0_i32 = arith.constant 0 : i32
    %c0_i32_0 = arith.constant 0 : i32
    return %arg0, %c0_i32 : i32, i32
  }
  func.func @transform_9(%arg0: i32) -> (i32, i32) {
    %c0_i32 = arith.constant 0 : i32
    %c0_i32_0 = arith.constant 0 : i32
    return %arg0, %c0_i32 : i32, i32
  }
}

</mosaic_0001>

<llo_original>
// kernel: cgpnet_forward.1
$region0: #{cgpnet_forward.1}
  #allocation0 [shape = 'u32[]', space=smem, size = 0x4, offset = 0x4, fixed_abs, tag = 'smem constant byte address 0x4 - core index']
  #allocation1 [shape = 'u32[144,128]{1,0:T(1,128)}', space=vmem, size = 0x12000, scoped, tag = 'internal scratch']
  %s0 = inlined_call_operand.vmem [shape: f32[8,2], index: 0, kind: input, shape index: {}]
  %s1 = inlined_call_operand.vmem [shape: f32[1,32], index: 1, kind: input, shape index: {}]
  %s2 = inlined_call_operand.vmem [shape: f32[1,16], index: 2, kind: input, shape index: {}]
  %s3 = inlined_call_operand.vmem [shape: f32[1,3], index: 3, kind: input, shape index: {}]
  %s4 = inlined_call_operand.vmem [shape: f32[1,32], index: 4, kind: input, shape index: {}]
  %s5 = inlined_call_operand.vmem [shape: f32[1,16], index: 5, kind: input, shape index: {}]
  %s6 = inlined_call_operand.vmem [shape: f32[1,3], index: 6, kind: input, shape index: {}]
  %s7 = inlined_call_operand.hbm [shape: f32[8,32], index: 7, kind: output, shape index: {0}]
  %s8 = inlined_call_operand.hbm [shape: f32[8,16], index: 8, kind: output, shape index: {1}]
  %s9 = inlined_call_operand.vmem [shape: f32[8,3], index: 9, kind: output, shape index: {2}]
  %10 = xla_tuple %s7, %s8, %s9
  %s11 = sld [smem:[#allocation0]]
  $region54: #{cgpnet_forward.1} parent=0
    _
  %s13 = ssub.s32 1, %s11
  %s14 = scalar_select 0, %s13, %s11
  $region1: #{cgpnet_forward.1} parent=0
    #allocation2 [shape = 'u8[4096]{0}', space=vmem, size = 0x1000, scoped, tag = 'output window, operand 0, single buffered']
    #allocation3 [shape = 's32[1]{0}', space=sflag, size = 0x4, scoped, tag = 'scoped memory for cgpnet_forward.1']
    #allocation4 [shape = 'u8[4096]{0}', space=vmem, size = 0x1000, scoped, tag = 'output window, operand 1, single buffered']
    #allocation5 [shape = 's32[1]{0}', space=sflag, size = 0x4, scoped, tag = 'scoped memory for cgpnet_forward.1']
    %15 = vsyncpa [#allocation3], 0
    %16 = vsyncpa [#allocation5], 0
    // Predicated region
    $region2: #{cgpnet_forward.1} parent=1 // pred_check
      _
    $region3: #{cgpnet_forward.1} parent=1 // pred_check_branch
      %18 = sbr.rel (0) target = $region5
    $region4: #{cgpnet_forward.1} parent=1 // pred_region
      _
    $region5: #{cgpnet_forward.1} parent=1 // pred_fallthru
      _
    // Predicated region
    $region6: #{cgpnet_forward.1} parent=1 // pred_check
      _
    $region7: #{cgpnet_forward.1} parent=1 // pred_check_branch
      %20 = sbr.rel (0) target = $region9
    $region8: #{cgpnet_forward.1} parent=1 // pred_region
      _
    $region9: #{cgpnet_forward.1} parent=1 // pred_fallthru
      _
    // Predicated region
    $region10: #{cgpnet_forward.1} parent=1 // pred_check
      _
    $region11: #{cgpnet_forward.1} parent=1 // pred_check_branch
      %22 = sbr.rel (0) target = $region13
    $region12: #{cgpnet_forward.1} parent=1 // pred_region
      _
    $region13: #{cgpnet_forward.1} parent=1 // pred_fallthru
      _
    // Predicated region
    $region14: #{cgpnet_forward.1} parent=1 // pred_check
      _
    $region15: #{cgpnet_forward.1} parent=1 // pred_check_branch
      %24 = sbr.rel (0) target = $region17
    $region16: #{cgpnet_forward.1} parent=1 // pred_region
      _
    $region17: #{cgpnet_forward.1} parent=1 // pred_fallthru
      _
    // Predicated region
    $region18: #{cgpnet_forward.1} parent=1 // pred_check
      _
    $region19: #{cgpnet_forward.1} parent=1 // pred_check_branch
      %26 = sbr.rel (0) target = $region21
    $region20: #{cgpnet_forward.1} parent=1 // pred_region
      _
    $region21: #{cgpnet_forward.1} parent=1 // pred_fallthru
      _
    // Predicated region
    $region22: #{cgpnet_forward.1} parent=1 // pred_check
      _
    $region23: #{cgpnet_forward.1} parent=1 // pred_check_branch
      %28 = sbr.rel (0) target = $region25
    $region24: #{cgpnet_forward.1} parent=1 // pred_region
      _
    $region25: #{cgpnet_forward.1} parent=1 // pred_fallthru
      _
    // Predicated region
    $region26: #{cgpnet_forward.1} parent=1 // pred_check
      _
    $region27: #{cgpnet_forward.1} parent=1 // pred_check_branch
      %30 = sbr.rel (0) target = $region29
    $region28: #{cgpnet_forward.1} parent=1 // pred_region
      _
    $region29: #{cgpnet_forward.1} parent=1 // pred_fallthru
      _
    %v31 = vld [vmem:[%s0] sm:$0xff]
    %v32 = vld [vmem:[%s1] sm:$0x1]
    %v33 = vld [vmem:[%s4] sm:$0x1]
    %35 = vrot.lane.b32.xlu0 %v31, 127
    %v36 = vpop.permute.xlu0 %35
    %v38 = vadd.f32 %v31, %v36
    %v39 = vand.u32 2147483647, %v38
    %vm40 = vcmp.le.f32.partialorder %v39, 0.7853982
    %vm41 = vcmp.lt.s32.totalorder %v38, 0
    %v42 = vand.u32 %v38, 2139095040
    %v43 = vshrl.u32 %v42, 23
    %v44 = vsub.s32 %v43, 127
    %v45 = vand.u32 2147483647, %v38
    %v46 = vand.u32 %v45, 8388607
    %v47 = vor.u32 %v46, 8388608
    %v48 = vsub.s32 0, %v47
    %v49 = vadd.s32 %v44, 1
    %vm50 = vcmp.gt.s32.totalorder %v49, 0
    %v51 = vsel %vm50, %v49, 0
    %v52 = vshrl.u32 %v51, 5
    %v53 = vand.u32 %v51, 31
    %v54 = vsub.s32 32, %v53
    %v55 = vshrl.u32 683565275, %v54
    %v56 = vshll.u32 683565275, %v53
    %v57 = vshrl.u32 2475754826, %v54
    %v58 = vor.u32 %v56, %v57
    %v59 = vshll.u32 2475754826, %v53
    %v60 = vshrl.u32 2131351028, %v54
    %v61 = vor.u32 %v59, %v60
    %v62 = vshll.u32 2131351028, %v53
    %v63 = vshrl.u32 2102212464, %v54
    %v64 = vor.u32 %v62, %v63
    %v65 = vshll.u32 2102212464, %v53
    %v66 = vshrl.u32 920167782, %v54
    %v67 = vor.u32 %v65, %v66
    %v68 = vshll.u32 920167782, %v53
    %v69 = vshrl.u32 1326507024, %v54
    %v70 = vor.u32 %v68, %v69
    %vm71 = vcmp.lt.s32.totalorder %v52, 1
    %vm72 = vcmp.lt.s32.totalorder %v52, 2
    %vm73 = vcmp.lt.s32.totalorder %v52, 3
    %vm74 = vcmp.lt.s32.totalorder %v52, 4
    %v75 = vsel %vm71, %v55, %v58
    %v76 = vsel %vm74, %v64, 2102212464
    %v77 = vsel %vm73, %v61, %v76
    %v78 = vsel %vm72, %v75, %v77
    %v79 = vsel %vm71, %v58, %v61
    %v80 = vsel %vm74, %v67, 920167782
    %v81 = vsel %vm73, %v64, %v80
    %v82 = vsel %vm72, %v79, %v81
    %v83 = vsel %vm71, %v61, %v64
    %v84 = vsel %vm74, %v70, 1326507024
    %v85 = vsel %vm73, %v67, %v84
    %v86 = vsel %vm72, %v83, %v85
    %v87 = vshll.u32 %v47, 8
    %v88 = vmul.u32.u64.compose %v87, %v86
    %v89 = vextract.low.u32 %v88
    %v90 = vextract.high.u32 %v88
    %v91 = vmul.u32.u64.compose %v87, %v82
    %v92 = vextract.low.u32 %v91
    %v93 = vextract.high.u32 %v91
    %v94 = vmul.u32 %v87, %v78
    %v95 = vadd.s32 %v90, %v92
    %vm96 = vc.u32 %v90, %v92
    %v97 = vadd.s32 %v93, 1
    %v98 = vsel %vm96, %v97, %v93
    %v99 = vadd.s32 %v94, %v98
    %v100 = vadd.s32 %v99, 536870912
    %v101 = vshrl.u32 %v100, 30
    %v102 = vshll.u32 %v101, 30
    %v103 = vsub.s32 %v99, %v102
    %vm104 = vcmp.lt.s32.totalorder %v103, 0
    %v105 = vsub.s32 0, %v103
    %v106 = vsel %vm104, %v105, %v103
    %v107 = vclz %v106
    %v108 = vsub.s32 %v107, 2
    %vm109 = vcmp.gt.s32.totalorder 0, %v108
    %v110 = vsel %vm109, 0, %v108
    %v111 = vsub.s32 32, %v110
    %v112 = vshll.u32 %v103, %v110
    %v113 = vshrl.u32 %v95, %v111
    %v114 = vor.u32 %v112, %v113
    %v115 = vsub.s32 4294967266, %v110
    %v116 = vadd.s32 %v115, 127
    %v117 = vshll.u32 %v116, 23
    %v118 = vor.u32 4788187, %v117
    %v119 = vand.u32 2147483647, %v118
    %v121 = vcvt.s32.f32 %v114
    %v122 = vmul.f32 %v121, %v119
    %v123 = vxor.u32 %v122, 2147483648
    %v124 = vsel %vm41, %v123, %v122
    %v125 = vsub.s32 4, %v101
    %v126 = vsel %vm41, %v125, %v101
    %v127 = vsel %vm40, %v38, %v124
    %v128 = vsel %vm40, 0, %v126
    %v129 = vcosq.f32.pop %v127
    %v130 = vsinq.f32.pop %v127
    %vm131 = vweird.f32 %v38
    %v132 = vadd.s32 %v128, 3
    %v133 = vand.u32 %v132, 3
    %vm134 = vcmp.lt.s32.totalorder %v133, 2
    %vm135 = vcmp.eq.s32.totalorder %v133, 0
    %v136 = vxor.u32 %v130, 2147483648
    %v137 = vsel %vm135, %v129, %v136
    %vm138 = vcmp.eq.s32.totalorder %v133, 2
    %v139 = vxor.u32 %v129, 2147483648
    %v140 = vsel %vm138, %v139, %v130
    %v141 = vsel %vm134, %v137, %v140
    %v142 = vsel %vm131, nan, %v141
    %v143 = vmul.f32 %v31, %v36
    %v144 = vadd.f32 %v142, %v143
    %146 = vset.pattern.permute.xlu0 0
    %147 = vperm.xlu0 %146, %v144
    %v148 = vpop.permute.xlu0 %147
    %v151 = vlaneseq
    %v152 = vshrl.u32 %v151, 7
    %v153 = vsub.s32 0, %v152
    %v154 = vrot.slane %v32, %v153
    %v156 = vmul.f32 %v148, %v154
    %v158 = vlaneseq
    %v159 = vshrl.u32 %v158, 7
    %v160 = vsub.s32 0, %v159
    %v161 = vrot.slane %v33, %v160
    %v163 = vadd.f32 %v156, %v161
    %vm164 = vcmask 261120
    %165 = vst.msk [vmem:[#allocation2] sm:$0xff] %vm164, %v163
    %v166 = vmul.f32 %v144, %v154
    %v167 = vadd.f32 %v166, %v161
    %168 = vrot.lane.b32.xlu0 %v154, 127
    %v169 = vpop.permute.xlu0 %168
    %v171 = vmul.f32 %v144, %v169
    %172 = vrot.lane.b32.xlu0 %v161, 127
    %v173 = vpop.permute.xlu0 %172
    %v175 = vadd.f32 %v171, %v173
    %v176 = vld [vmem:[%s2] sm:$0x1]
    %v177 = vld [vmem:[%s5] sm:$0x1]
    %v178 = vadd.f32 %v167, %v175
    %v179 = vand.u32 2147483647, %v178
    %vm180 = vcmp.le.f32.partialorder %v179, 0.7853982
    %vm181 = vcmp.lt.s32.totalorder %v178, 0
    %v182 = vand.u32 %v178, 2139095040
    %v183 = vshrl.u32 %v182, 23
    %v184 = vsub.s32 %v183, 127
    %v185 = vand.u32 2147483647, %v178
    %v186 = vand.u32 %v185, 8388607
    %v187 = vor.u32 %v186, 8388608
    %v188 = vsub.s32 0, %v187
    %v189 = vadd.s32 %v184, 1
    %vm190 = vcmp.gt.s32.totalorder %v189, 0
    %v191 = vsel %vm190, %v189, 0
    %v192 = vshrl.u32 %v191, 5
    %v193 = vand.u32 %v191, 31
    %v194 = vsub.s32 32, %v193
    %v195 = vshrl.u32 683565275, %v194
    %v196 = vshll.u32 683565275, %v193
    %v197 = vshrl.u32 2475754826, %v194
    %v198 = vor.u32 %v196, %v197
    %v199 = vshll.u32 2475754826, %v193
    %v200 = vshrl.u32 2131351028, %v194
    %v201 = vor.u32 %v199, %v200
    %v202 = vshll.u32 2131351028, %v193
    %v203 = vshrl.u32 2102212464, %v194
    %v204 = vor.u32 %v202, %v203
    %v205 = vshll.u32 2102212464, %v193
    %v206 = vshrl.u32 920167782, %v194
    %v207 = vor.u32 %v205, %v206
    %v208 = vshll.u32 920167782, %v193
    %v209 = vshrl.u32 1326507024, %v194
    %v210 = vor.u32 %v208, %v209
    %vm211 = vcmp.lt.s32.totalorder %v192, 1
    %vm212 = vcmp.lt.s32.totalorder %v192, 2
    %vm213 = vcmp.lt.s32.totalorder %v192, 3
    %vm214 = vcmp.lt.s32.totalorder %v192, 4
    %v215 = vsel %vm211, %v195, %v198
    %v216 = vsel %vm214, %v204, 2102212464
    %v217 = vsel %vm213, %v201, %v216
    %v218 = vsel %vm212, %v215, %v217
    %v219 = vsel %vm211, %v198, %v201
    %v220 = vsel %vm214, %v207, 920167782
    %v221 = vsel %vm213, %v204, %v220
    %v222 = vsel %vm212, %v219, %v221
    %v223 = vsel %vm211, %v201, %v204
    %v224 = vsel %vm214, %v210, 1326507024
    %v225 = vsel %vm213, %v207, %v224
    %v226 = vsel %vm212, %v223, %v225
    %v227 = vshll.u32 %v187, 8
    %v228 = vmul.u32.u64.compose %v227, %v226
    %v229 = vextract.low.u32 %v228
    %v230 = vextract.high.u32 %v228
    %v231 = vmul.u32.u64.compose %v227, %v222
    %v232 = vextract.low.u32 %v231
    %v233 = vextract.high.u32 %v231
    %v234 = vmul.u32 %v227, %v218
    %v235 = vadd.s32 %v230, %v232
    %vm236 = vc.u32 %v230, %v232
    %v237 = vadd.s32 %v233, 1
    %v238 = vsel %vm236, %v237, %v233
    %v239 = vadd.s32 %v234, %v238
    %v240 = vadd.s32 %v239, 536870912
    %v241 = vshrl.u32 %v240, 30
    %v242 = vshll.u32 %v241, 30
    %v243 = vsub.s32 %v239, %v242
    %vm244 = vcmp.lt.s32.totalorder %v243, 0
    %v245 = vsub.s32 0, %v243
    %v246 = vsel %vm244, %v245, %v243
    %v247 = vclz %v246
    %v248 = vsub.s32 %v247, 2
    %vm249 = vcmp.gt.s32.totalorder 0, %v248
    %v250 = vsel %vm249, 0, %v248
    %v251 = vsub.s32 32, %v250
    %v252 = vshll.u32 %v243, %v250
    %v253 = vshrl.u32 %v235, %v251
    %v254 = vor.u32 %v252, %v253
    %v255 = vsub.s32 4294967266, %v250
    %v256 = vadd.s32 %v255, 127
    %v257 = vshll.u32 %v256, 23
    %v258 = vor.u32 4788187, %v257
    %v259 = vand.u32 2147483647, %v258
    %v261 = vcvt.s32.f32 %v254
    %v262 = vmul.f32 %v261, %v259
    %v263 = vxor.u32 %v262, 2147483648
    %v264 = vsel %vm181, %v263, %v262
    %v265 = vsub.s32 4, %v241
    %v266 = vsel %vm181, %v265, %v241
    %v267 = vsel %vm180, %v178, %v264
    %v268 = vsel %vm180, 0, %v266
    %v269 = vcosq.f32.pop %v267
    %v270 = vsinq.f32.pop %v267
    %vm271 = vweird.f32 %v178
    %v272 = vadd.s32 %v268, 3
    %v273 = vand.u32 %v272, 3
    %vm274 = vcmp.lt.s32.totalorder %v273, 2
    %vm275 = vcmp.eq.s32.totalorder %v273, 0
    %v276 = vxor.u32 %v270, 2147483648
    %v277 = vsel %vm275, %v269, %v276
    %vm278 = vcmp.eq.s32.totalorder %v273, 2
    %v279 = vxor.u32 %v269, 2147483648
    %v280 = vsel %vm278, %v279, %v270
    %v281 = vsel %vm274, %v277, %v280
    %v282 = vsel %vm271, nan, %v281
    %v283 = vmul.f32 %v167, %v175
    %v284 = vadd.f32 %v282, %v283
    %286 = vset.pattern.permute.xlu0 0
    %287 = vperm.xlu0 %286, %v284
    %v288 = vpop.permute.xlu0 %287
    %v291 = vlaneseq
    %v292 = vshrl.u32 %v291, 7
    %v293 = vsub.s32 0, %v292
    %v294 = vrot.slane %v176, %v293
    %v296 = vmul.f32 %v288, %v294
    %v298 = vlaneseq
    %v299 = vshrl.u32 %v298, 7
    %v300 = vsub.s32 0, %v299
    %v301 = vrot.slane %v177, %v300
    %v303 = vadd.f32 %v296, %v301
    %vm304 = vcmask 130048
    %305 = vst.msk [vmem:[#allocation4] sm:$0xff] %vm304, %v303
    %v306 = vmul.f32 %v284, %v294
    %v307 = vadd.f32 %v306, %v301
    %308 = vrot.lane.b32.xlu0 %v294, 127
    %v309 = vpop.permute.xlu0 %308
    %v311 = vmul.f32 %v284, %v309
    %312 = vrot.lane.b32.xlu0 %v301, 127
    %v313 = vpop.permute.xlu0 %312
    %v315 = vadd.f32 %v311, %v313
    %v316 = vld [vmem:[%s3] sm:$0x1]
    %v317 = vld [vmem:[%s6] sm:$0x1]
    %v318 = vadd.f32 %v307, %v315
    %v319 = vand.u32 2147483647, %v318
    %vm320 = vcmp.le.f32.partialorder %v319, 0.7853982
    %vm321 = vcmp.lt.s32.totalorder %v318, 0
    %v322 = vand.u32 %v318, 2139095040
    %v323 = vshrl.u32 %v322, 23
    %v324 = vsub.s32 %v323, 127
    %v325 = vand.u32 2147483647, %v318
    %v326 = vand.u32 %v325, 8388607
    %v327 = vor.u32 %v326, 8388608
    %v328 = vsub.s32 0, %v327
    %v329 = vadd.s32 %v324, 1
    %vm330 = vcmp.gt.s32.totalorder %v329, 0
    %v331 = vsel %vm330, %v329, 0
    %v332 = vshrl.u32 %v331, 5
    %v333 = vand.u32 %v331, 31
    %v334 = vsub.s32 32, %v333
    %v335 = vshrl.u32 683565275, %v334
    %v336 = vshll.u32 683565275, %v333
    %v337 = vshrl.u32 2475754826, %v334
    %v338 = vor.u32 %v336, %v337
    %v339 = vshll.u32 2475754826, %v333
    %v340 = vshrl.u32 2131351028, %v334
    %v341 = vor.u32 %v339, %v340
    %v342 = vshll.u32 2131351028, %v333
    %v343 = vshrl.u32 2102212464, %v334
    %v344 = vor.u32 %v342, %v343
    %v345 = vshll.u32 2102212464, %v333
    %v346 = vshrl.u32 920167782, %v334
    %v347 = vor.u32 %v345, %v346
    %v348 = vshll.u32 920167782, %v333
    %v349 = vshrl.u32 1326507024, %v334
    %v350 = vor.u32 %v348, %v349
    %vm351 = vcmp.lt.s32.totalorder %v332, 1
    %vm352 = vcmp.lt.s32.totalorder %v332, 2
    %vm353 = vcmp.lt.s32.totalorder %v332, 3
    %vm354 = vcmp.lt.s32.totalorder %v332, 4
    %v355 = vsel %vm351, %v335, %v338
    %v356 = vsel %vm354, %v344, 2102212464
    %v357 = vsel %vm353, %v341, %v356
    %v358 = vsel %vm352, %v355, %v357
    %v359 = vsel %vm351, %v338, %v341
    %v360 = vsel %vm354, %v347, 920167782
    %v361 = vsel %vm353, %v344, %v360
    %v362 = vsel %vm352, %v359, %v361
    %v363 = vsel %vm351, %v341, %v344
    %v364 = vsel %vm354, %v350, 1326507024
    %v365 = vsel %vm353, %v347, %v364
    %v366 = vsel %vm352, %v363, %v365
    %v367 = vshll.u32 %v327, 8
    %v368 = vmul.u32.u64.compose %v367, %v366
    %v369 = vextract.low.u32 %v368
    %v370 = vextract.high.u32 %v368
    %v371 = vmul.u32.u64.compose %v367, %v362
    %v372 = vextract.low.u32 %v371
    %v373 = vextract.high.u32 %v371
    %v374 = vmul.u32 %v367, %v358
    %v375 = vadd.s32 %v370, %v372
    %vm376 = vc.u32 %v370, %v372
    %v377 = vadd.s32 %v373, 1
    %v378 = vsel %vm376, %v377, %v373
    %v379 = vadd.s32 %v374, %v378
    %v380 = vadd.s32 %v379, 536870912
    %v381 = vshrl.u32 %v380, 30
    %v382 = vshll.u32 %v381, 30
    %v383 = vsub.s32 %v379, %v382
    %vm384 = vcmp.lt.s32.totalorder %v383, 0
    %v385 = vsub.s32 0, %v383
    %v386 = vsel %vm384, %v385, %v383
    %v387 = vclz %v386
    %v388 = vsub.s32 %v387, 2
    %vm389 = vcmp.gt.s32.totalorder 0, %v388
    %v390 = vsel %vm389, 0, %v388
    %v391 = vsub.s32 32, %v390
    %v392 = vshll.u32 %v383, %v390
    %v393 = vshrl.u32 %v375, %v391
    %v394 = vor.u32 %v392, %v393
    %v395 = vsub.s32 4294967266, %v390
    %v396 = vadd.s32 %v395, 127
    %v397 = vshll.u32 %v396, 23
    %v398 = vor.u32 4788187, %v397
    %v399 = vand.u32 2147483647, %v398
    %v401 = vcvt.s32.f32 %v394
    %v402 = vmul.f32 %v401, %v399
    %v403 = vxor.u32 %v402, 2147483648
    %v404 = vsel %vm321, %v403, %v402
    %v405 = vsub.s32 4, %v381
    %v406 = vsel %vm321, %v405, %v381
    %v407 = vsel %vm320, %v318, %v404
    %v408 = vsel %vm320, 0, %v406
    %v409 = vcosq.f32.pop %v407
    %v410 = vsinq.f32.pop %v407
    %vm411 = vweird.f32 %v318
    %v412 = vadd.s32 %v408, 3
    %v413 = vand.u32 %v412, 3
    %vm414 = vcmp.lt.s32.totalorder %v413, 2
    %vm415 = vcmp.eq.s32.totalorder %v413, 0
    %v416 = vxor.u32 %v410, 2147483648
    %v417 = vsel %vm415, %v409, %v416
    %vm418 = vcmp.eq.s32.totalorder %v413, 2
    %v419 = vxor.u32 %v409, 2147483648
    %v420 = vsel %vm418, %v419, %v410
    %v421 = vsel %vm414, %v417, %v420
    %v422 = vsel %vm411, nan, %v421
    %v423 = vmul.f32 %v307, %v315
    %v424 = vadd.f32 %v422, %v423
    %426 = vset.pattern.permute.xlu0 0
    %427 = vperm.xlu0 %426, %v424
    %v428 = vpop.permute.xlu0 %427
    %v431 = vlaneseq
    %v432 = vshrl.u32 %v431, 7
    %v433 = vsub.s32 0, %v432
    %v434 = vrot.slane %v316, %v433
    %v436 = vmul.f32 %v428, %v434
    %v438 = vlaneseq
    %v439 = vshrl.u32 %v438, 7
    %v440 = vsub.s32 0, %v439
    %v441 = vrot.slane %v317, %v440
    %v443 = vadd.f32 %v436, %v441
    %vm444 = vcmask 23552
    %445 = vst.msk [vmem:[%s9] sm:$0xff] %vm444, %v443
    // Predicated region
    $region30: #{cgpnet_forward.1} parent=1 // pred_check
      _
    $region31: #{cgpnet_forward.1} parent=1 // pred_check_branch
      %447 = sbr.rel (0) target = $region33
    $region32: #{cgpnet_forward.1} parent=1 // pred_region
      %s449 = ssub.s32 128, 128
      %450 = vsyncadd [#allocation3], %s449
      %s452 = sshll.u32 [#allocation2], 4
      %s453 = int_to_ptr.vmem [resolvable:$true] %s452
      %455 = dma.vmem_to_hbm [thread:$0]  %s453, 128, %s7, [#allocation3]
    $region33: #{cgpnet_forward.1} parent=1 // pred_fallthru
      _
    // Predicated region
    $region34: #{cgpnet_forward.1} parent=1 // pred_check
      _
    $region35: #{cgpnet_forward.1} parent=1 // pred_check_branch
      %457 = sbr.rel (0) target = $region37
    $region36: #{cgpnet_forward.1} parent=1 // pred_region
      %s459 = ssub.s32 128, 128
      %460 = vsyncadd [#allocation5], %s459
      %s462 = sshll.u32 [#allocation4], 4
      %s463 = int_to_ptr.vmem [resolvable:$true] %s462
      %465 = dma.vmem_to_hbm [thread:$0]  %s463, 128, %s8, [#allocation5]
    $region37: #{cgpnet_forward.1} parent=1 // pred_fallthru
      _
    // Predicated region
    $region38: #{cgpnet_forward.1} parent=1 // pred_check
      _
    $region39: #{cgpnet_forward.1} parent=1 // pred_check_branch
      %467 = sbr.rel (0) target = $region41
    $region40: #{cgpnet_forward.1} parent=1 // pred_region
      _
    $region41: #{cgpnet_forward.1} parent=1 // pred_fallthru
      _
    // Predicated region
    $region42: #{cgpnet_forward.1} parent=1 // pred_check
      _
    $region43: #{cgpnet_forward.1} parent=1 // pred_check_branch
      %469 = sbr.rel (0) target = $region45
    $region44: #{cgpnet_forward.1} parent=1 // pred_region
      %470 = dma.done [#allocation3], 128
    $region45: #{cgpnet_forward.1} parent=1 // pred_fallthru
      _
    // Predicated region
    $region46: #{cgpnet_forward.1} parent=1 // pred_check
      _
    $region47: #{cgpnet_forward.1} parent=1 // pred_check_branch
      %472 = sbr.rel (0) target = $region49
    $region48: #{cgpnet_forward.1} parent=1 // pred_region
      %473 = dma.done [#allocation5], 128
    $region49: #{cgpnet_forward.1} parent=1 // pred_fallthru
      _
    // Predicated region
    $region50: #{cgpnet_forward.1} parent=1 // pred_check
      _
    $region51: #{cgpnet_forward.1} parent=1 // pred_check_branch
      %475 = sbr.rel (0) target = $region53
    $region52: #{cgpnet_forward.1} parent=1 // pred_region
      _
    $region53: #{cgpnet_forward.1} parent=1 // pred_fallthru
      _
    %476 = vsyncpa [#allocation3], 1
    %477 = vsyncpa [#allocation5], 1

</llo_original>
